<compile_context>
chip_gen: v7x
topology: tpu7x:2x2x1
jax: 0.10.0
libtpu: 0.0.40
codegen_flags: <defaults>
</compile_context>

<pallas_src>
import functools

import jax
import jax.numpy as jnp
from jax.experimental import pallas as pl
from jax.experimental.pallas import tpu as pltpu

EPS = 1e-5

# bf16 MXU operands (918/996 TF/s on v6e/v7x); f32 accumulation + epilogue.
MXU_DTYPE = jnp.bfloat16
_MXU_BYTES = jnp.dtype(MXU_DTYPE).itemsize
_SUBLANE = 16 if MXU_DTYPE == jnp.bfloat16 else 8   # bf16 packs [16,128] per vreg
_TOL = 5e-2 if MXU_DTYPE == jnp.bfloat16 else 1e-4  # dtype-aware check tolerance

# 3x3 taps: kernel rows oh in (-1,0,1), columns ow in (-1,0,1).
_OFFS = (-1, 0, 1)


# --------------------------------------------------------------------------
# pltpu.roll direction probe: we need  shifted[:, p] = x[:, (p + delta) % P].
# Determine the roll sign convention empirically once so the kernel is robust
# across jax versions.
# --------------------------------------------------------------------------
_ROLL_LIKE_JNP_CACHE = []


def _pltpu_roll_matches_jnp_roll() -> bool:
    if not _ROLL_LIKE_JNP_CACHE:
        def probe(x_ref, o_ref):
            o_ref[...] = pltpu.roll(x_ref[...], 1, axis=1)

        x = jnp.tile(jnp.arange(128, dtype=jnp.float32)[None, :], (8, 1))
        out = pl.pallas_call(
            probe, out_shape=jax.ShapeDtypeStruct((8, 128), jnp.float32))(x)
        # jnp.roll semantics => out[0, 1] == x[0, 0] == 0
        _ROLL_LIKE_JNP_CACHE.append(bool(float(out[0, 1]) == 0.0))
    return _ROLL_LIKE_JNP_CACHE[0]


def _shift_pixels(a, delta, roll_like_jnp):
    """Return b with b[:, p] = a[:, (p + delta) % P] (wrap positions masked later)."""
    P = a.shape[-1]
    if delta % P == 0:
        return a
    amount = (-delta) % P if roll_like_jnp else delta % P
    return pltpu.roll(a, amount, axis=1)


# --------------------------------------------------------------------------
# Kernel
# --------------------------------------------------------------------------
def _double_conv_kernel(x_ref, w1_ref, s1_ref, b1_ref, w2_ref, s2_ref, b2_ref,
                        o_ref, *, img_h, img_w, pix_pad, roll_like_jnp):
    # x_ref : (Cin_p, P)            channels on sublanes, pixels lane-dense (f32)
    # w*_ref: (3, Cout_p, 3*C)      per-kernel-row weight slabs (MXU_DTYPE)
    # s*/b* : (Cout_p, 1)           folded BatchNorm scale / bias (f32)
    # o_ref : (Cout_p, P)
    P = o_ref.shape[-1]

    # Per-tap validity masks generated in-kernel (iota + a few compares on the
    # VPU; hidden under the matmuls).  Shared by both conv passes.
    lane = jax.lax.broadcasted_iota(jnp.int32, (1, P), 1)
    p = lane % pix_pad                      # pixel index within its (padded) image
    hh = p // img_w
    ww = p - hh * img_w
    row_ok = {-1: hh >= 1, 0: None, 1: hh < img_h - 1}
    col_ok = {-1: ww >= 1, 0: None, 1: ww < img_w - 1}

    def tap_mask(oh, ow):
        m, c = row_ok[oh], col_ok[ow]
        if m is None:
            return c            # None for the center tap (always valid)
        return m if c is None else (m & c)

    def conv_bn_relu(a, w_ref, s_ref, b_ref):
        # a: (C, P) f32.  One (Cout, 3*C) x (3*C, P) bf16 MXU matmul per kernel
        # row, f32-accumulated; only one 3*C x P slab live at a time.
        acc = None
        for r, oh in enumerate(_OFFS):
            pieces = []
            for ow in _OFFS:
                shifted = _shift_pixels(a, oh * img_w + ow, roll_like_jnp)
                m = tap_mask(oh, ow)
                if m is not None:
                    # where (not *mask): padding Inf/NaN cannot leak via 0*Inf.
                    shifted = jnp.where(m, shifted, 0.0)
                pieces.append(shifted.astype(MXU_DTYPE))
            slab = jnp.concatenate(pieces, axis=0)          # (3*C, P) bf16
            part = jnp.dot(w_ref[r], slab, preferred_element_type=jnp.float32)
            acc = part if acc is None else acc + part
        # folded BatchNorm (eval mode) + ReLU, f32, lane-dense
        return jnp.maximum(acc * s_ref[...] + b_ref[...], 0.0)

    y = conv_bn_relu(x_ref[...], w1_ref, s1_ref, b1_ref)
    z = conv_bn_relu(y, w2_ref, s2_ref, b2_ref)
    o_ref[...] = z.astype(o_ref.dtype)       # unmasked, lane-dense store


# --------------------------------------------------------------------------
# Wrapper helpers
# --------------------------------------------------------------------------
def _round_up(n, m):
    return (n + m - 1) // m * m


def _vmem_capacity_bytes():
    try:
        return int(pltpu.get_tpu_info().vmem_capacity_bytes)
    except Exception:
        return 128 * 1024 * 1024   # conservative default (v5e/v6e)


def _num_tensorcores():
    try:
        d = jax.devices()[0]
        for attr in ("num_cores", "core_count", "num_tensorcores"):
            v = getattr(d, attr, None)
            if isinstance(v, int) and 1 <= v <= 8:
                return v
        kind = str(getattr(d, "device_kind", "")).lower()
        if ("v4" in kind) or ("v5p" in kind) or ("7" in kind):
            return 2               # megacore / 2-TC parts
    except Exception:
        pass
    return 1


def _choose_images_per_block(n_imgs, pix_pad, cin_p, cout_p, vmem_budget, num_tc):
    """Largest divisor nb of n_imgs whose block working set fits the VMEM budget,
    preferring >= num_tc grid steps so 'parallel' spans all TensorCores."""
    cmax = max(cin_p, cout_p)
    bytes_per_lane = (2 * cin_p * 4          # double-buffered f32 input block
                      + 2 * cout_p * 4       # double-buffered f32 output block
                      + 2 * cout_p * 4       # y + acc f32 temporaries
                      + 2 * 3 * cmax * _MXU_BYTES)   # live im2col row slabs
    max_lanes = max(pix_pad, vmem_budget // max(bytes_per_lane, 1))
    nb_cap = max(1, min(n_imgs, max_lanes // pix_pad))
    for want_groups in (num_tc, 1):
        for nb in range(nb_cap, 0, -1):
            if n_imgs % nb == 0 and (n_imgs // nb) >= want_groups:
                return nb
    return 1


# --------------------------------------------------------------------------
# Wrapper
# --------------------------------------------------------------------------
@functools.partial(jax.jit,
                   static_argnames=("nb", "vmem_limit", "roll_like_jnp"))
def _double_conv_impl(x_nchw, w1, g1, be1, rm1, rv1, w2, g2, be2, rm2, rv2,
                      *, nb, vmem_limit, roll_like_jnp):
    N, Cin, H, W = x_nchw.shape
    Cout = w1.shape[0]
    Cin_p = _round_up(Cin, _SUBLANE)
    Cout_p = _round_up(Cout, _SUBLANE)
    PIX = H * W
    PIX_p = _round_up(PIX, 128)        # per-image pad -> every block 128-lane aligned
    G = N // nb
    P_blk = nb * PIX_p
    P_tot = N * PIX_p

    # activations: NCHW -> (Cin_p, N*PIX_p); channels on sublanes, pixels lane-dense
    x = jnp.transpose(x_nchw, (1, 0, 2, 3)).reshape(Cin, N, PIX)
    if PIX_p != PIX:
        x = jnp.pad(x, ((0, 0), (0, 0), (0, PIX_p - PIX)))
    x = x.reshape(Cin, P_tot)
    if Cin_p != Cin:
        x = jnp.pad(x, ((0, Cin_p - Cin), (0, 0)))

    # conv weights OIHW -> (3 kernel rows, Cout_p, 3*Cin_p) in MXU dtype;
    # column = kw*Cin_p + cin, matching the kernel's per-row im2col slab order.
    def pack_w(w, ci_p, co_p):
        co, ci = w.shape[0], w.shape[1]
        wp = jnp.zeros((co_p, ci_p, 3, 3), jnp.float32)
        wp = wp.at[:co, :ci].set(w.astype(jnp.float32))
        return jnp.transpose(wp, (2, 0, 3, 1)).reshape(3, co_p, 3 * ci_p).astype(MXU_DTYPE)

    w1_mat = pack_w(w1, Cin_p, Cout_p)
    w2_mat = pack_w(w2, Cout_p, Cout_p)

    # fold BatchNorm (eval mode) into per-channel scale / bias, (Cout_p, 1) f32
    def pack_bn(g, b, rm, rv):
        s = g / jnp.sqrt(rv + EPS)
        t = b - rm * s
        s_p = jnp.zeros((Cout_p,), jnp.float32).at[:Cout].set(s)
        t_p = jnp.zeros((Cout_p,), jnp.float32).at[:Cout].set(t)
        return s_p.reshape(Cout_p, 1), t_p.reshape(Cout_p, 1)

    s1, b1 = pack_bn(g1, be1, rm1, rv1)
    s2, b2 = pack_bn(g2, be2, rm2, rv2)

    kernel = functools.partial(_double_conv_kernel, img_h=H, img_w=W,
                               pix_pad=PIX_p, roll_like_jnp=roll_like_jnp)

    flops = 2 * P_tot * 9 * (Cin_p * Cout_p + Cout_p * Cout_p)
    bytes_accessed = (4 * (Cin_p + Cout_p) * P_tot
                      + _MXU_BYTES * 9 * (Cin_p + Cout_p) * Cout_p
                      + 4 * 4 * Cout_p)

    out = pl.pallas_call(
        kernel,
        out_shape=jax.ShapeDtypeStruct((Cout_p, P_tot), jnp.float32),
        grid_spec=pltpu.PrefetchScalarGridSpec(
            num_scalar_prefetch=0,
            grid=(G,),                    # image-group blocks; megacore-parallel
            in_specs=[
                pl.BlockSpec((Cin_p, P_blk), lambda g: (0, g)),
                pl.BlockSpec((3, Cout_p, 3 * Cin_p), lambda g: (0, 0, 0)),
                pl.BlockSpec((Cout_p, 1), lambda g: (0, 0)),
                pl.BlockSpec((Cout_p, 1), lambda g: (0, 0)),
                pl.BlockSpec((3, Cout_p, 3 * Cout_p), lambda g: (0, 0, 0)),
                pl.BlockSpec((Cout_p, 1), lambda g: (0, 0)),
                pl.BlockSpec((Cout_p, 1), lambda g: (0, 0)),
            ],
            out_specs=pl.BlockSpec((Cout_p, P_blk), lambda g: (0, g)),
        ),
        compiler_params=pltpu.CompilerParams(
            dimension_semantics=("parallel",),
            vmem_limit_bytes=vmem_limit),
        cost_estimate=pl.CostEstimate(flops=int(flops), transcendentals=0,
                                      bytes_accessed=int(bytes_accessed)),
    )(x, w1_mat, s1, b1, w2_mat, s2, b2)

    # (Cout_p, N*PIX_p) -> NCHW, dropping channel and pixel padding
    out = out.reshape(Cout_p, N, PIX_p)[:Cout, :, :PIX].reshape(Cout, N, H, W)
    return jnp.transpose(out, (1, 0, 2, 3))


def double_conv(x_nchw, w1, g1, be1, rm1, rv1, w2, g2, be2, rm2, rv2):
    """x_nchw: (N, Cin, H, W) f32.  Conv weights in PyTorch OIHW layout, bias=False."""
    N, Cin, H, W = x_nchw.shape
    Cout = w1.shape[0]
    Cin_p = _round_up(Cin, _SUBLANE)
    Cout_p = _round_up(Cout, _SUBLANE)
    PIX_p = _round_up(H * W, 128)

    vmem_cap = _vmem_capacity_bytes()
    nb = _choose_images_per_block(N, PIX_p, Cin_p, Cout_p,
                                  vmem_budget=vmem_cap // 2,
                                  num_tc=_num_tensorcores())
    # ~48 MiB on 64-MiB parts (v7x), ~96 MiB on 128-MiB parts (v5e/v6e)
    vmem_limit = max(32 * 1024 * 1024, (vmem_cap * 3) // 4)

    return _double_conv_impl(x_nchw, w1, g1, be1, rm1, rv1, w2, g2, be2, rm2, rv2,
                             nb=int(nb), vmem_limit=int(vmem_limit),
                             roll_like_jnp=_pltpu_roll_matches_jnp_roll())


# --------------------------------------------------------------------------
# Pure-JAX reference (NCHW conv + eval-mode BN + ReLU)
# --------------------------------------------------------------------------
def _reference(x_nchw, w1, g1, be1, rm1, rv1, w2, g2, be2, rm2, rv2):
    def conv(x, w):
        return jax.lax.conv_general_dilated(
            x, w, window_strides=(1, 1), padding=((1, 1), (1, 1)),
            dimension_numbers=("NCHW", "OIHW", "NCHW"))

    def bn(x, g, b, rm, rv):
        g = g.reshape(1, -1, 1, 1); b = b.reshape(1, -1, 1, 1)
        rm = rm.reshape(1, -1, 1, 1); rv = rv.reshape(1, -1, 1, 1)
        return (x - rm) / jnp.sqrt(rv + EPS) * g + b

    y = jnp.maximum(bn(conv(x_nchw, w1), g1, be1, rm1, rv1), 0.0)
    z = jnp.maximum(bn(conv(y, w2), g2, be2, rm2, rv2), 0.0)
    return z


if __name__ == "__main__":
    N, Cin, Cout, H, W = 2, 4, 8, 16, 16

    key = jax.random.PRNGKey(0)
    keys = jax.random.split(key, 8)

    x = jax.random.normal(keys[0], (N, Cin, H, W), jnp.float32)

    # conv weights (PyTorch OIHW layout), bias=False
    w1 = jax.random.normal(keys[1], (Cout, Cin, 3, 3), jnp.float32) * 0.1
    w2 = jax.random.normal(keys[2], (Cout, Cout, 3, 3), jnp.float32) * 0.1

    # BN1 params + running stats
    g1 = 1.0 + 0.1 * jax.random.normal(keys[3], (Cout,), jnp.float32)
    be1 = 0.1 * jax.random.normal(keys[4], (Cout,), jnp.float32)
    rm1 = 0.05 * jax.random.normal(keys[5], (Cout,), jnp.float32)
    rv1 = 1.0 + 0.1 * jnp.abs(jax.random.normal(keys[6], (Cout,), jnp.float32))

    # BN2 params + running stats
    g2 = 1.0 + 0.1 * jax.random.normal(keys[7], (Cout,), jnp.float32)
    be2 = jnp.linspace(-0.1, 0.1, Cout, dtype=jnp.float32)
    rm2 = jnp.linspace(-0.05, 0.05, Cout, dtype=jnp.float32)
    rv2 = jnp.linspace(0.9, 1.1, Cout, dtype=jnp.float32)

    out = double_conv(x, w1, g1, be1, rm1, rv1, w2, g2, be2, rm2, rv2)
    out = jax.block_until_ready(out)

    ref = _reference(x, w1, g1, be1, rm1, rv1, w2, g2, be2, rm2, rv2)
    assert out.shape == (N, Cout, H, W), out.shape
    # Tolerance is dtype-aware: bf16 MXU operands need a looser bound than f32.
    assert jnp.allclose(out, ref, atol=_TOL, rtol=_TOL), float(
        jnp.max(jnp.abs(out - ref)))

    print("KERNEL_OK")
</pallas_src>

<mosaic_0001>
module attributes {stable_mosaic.version = 11 : i64} {
  func.func @probe(%arg0: memref<8x128xf32, #tpu.memory_space<vmem>>, %arg1: memref<8x128xf32, #tpu.memory_space<vmem>>) attributes {dimension_semantics = [], scalar_prefetch = 0 : i64, scratch_operands = 0 : i64, tpu.core_type = #tpu.core_type<tc>} {
    %c0 = arith.constant 0 : index
    %c0_0 = arith.constant 0 : index
    %0 = vector.load %arg0[%c0, %c0_0] : memref<8x128xf32, #tpu.memory_space<vmem>>, vector<8x128xf32>
    %c1_i32 = arith.constant 1 : i32
    %1 = tpu.dynamic_rotate %0 by %c1_i32 dim 1 : vector<8x128xf32>, i32 -> vector<8x128xf32>
    %c0_1 = arith.constant 0 : index
    %c0_2 = arith.constant 0 : index
    %2 = vector.load %arg1[%c0_1, %c0_2] : memref<8x128xf32, #tpu.memory_space<vmem>>, vector<8x128xf32>
    tpu.vector_store %arg1[%c0_1, %c0_2], %1 {strides = array<i32>} : memref<8x128xf32, #tpu.memory_space<vmem>>, vector<8x128xf32>,
    return
  }
}

</mosaic_0001>

<llo_original>
// kernel: tpu_custom_call.1
$region0: #{tpu_custom_call.1}
  #allocation0 [shape = 'u32[]', space=smem, size = 0x4, offset = 0x4, fixed_abs, tag = 'smem constant byte address 0x4 - core index']
  #allocation1 [shape = 'u32[144,128]{1,0:T(1,128)}', space=vmem, size = 0x12000, scoped, tag = 'internal scratch']
  %s0 = inlined_call_operand.hbm [shape: f32[8,128], index: 0, kind: input, shape index: {}]
  %s1 = inlined_call_operand.hbm [shape: f32[8,128], index: 1, kind: output, shape index: {}]
  %s2 = sld [smem:[#allocation0]]
  $region18: #{tpu_custom_call.1} parent=0
    _
  %s4 = ssub.s32 1, %s2
  %s5 = scalar_select 0, %s4, %s2
  $region1: #{tpu_custom_call.1} parent=0
    #allocation2 [shape = 'u8[4096]{0}', space=vmem, size = 0x1000, scoped, tag = 'input window, operand 0, single buffered']
    #allocation3 [shape = 's32[1]{0}', space=sflag, size = 0x4, scoped, tag = 'scoped memory for tpu_custom_call.1']
    #allocation4 [shape = 's32[1]{0}', space=sflag, size = 0x4, scoped, tag = 'scoped memory for tpu_custom_call.1']
    #allocation5 [shape = 'u8[4096]{0}', space=vmem, size = 0x1000, scoped, tag = 'output window, operand 0, single buffered']
    %6 = vsyncpa [#allocation3], 0
    %7 = vsyncpa [#allocation4], 0
    // Predicated region
    $region2: #{tpu_custom_call.1} parent=1 // pred_check
      _
    $region3: #{tpu_custom_call.1} parent=1 // pred_check_branch
      %9 = sbr.rel (0) target = $region5
    $region4: #{tpu_custom_call.1} parent=1 // pred_region
      %s11 = ssub.s32 128, 128
      %12 = vsyncadd [#allocation3], %s11
      %s14 = sshll.u32 [#allocation2], 4
      %s15 = int_to_ptr.vmem [resolvable:$true] %s14
      %17 = dma.hbm_to_vmem [thread:$0]  %s0, 128, %s15, [#allocation3]
    $region5: #{tpu_custom_call.1} parent=1 // pred_fallthru
      _
    // Predicated region
    $region6: #{tpu_custom_call.1} parent=1 // pred_check
      _
    $region7: #{tpu_custom_call.1} parent=1 // pred_check_branch
      %19 = sbr.rel (0) target = $region9
    $region8: #{tpu_custom_call.1} parent=1 // pred_region
      %20 = dma.done [#allocation3], 128
    $region9: #{tpu_custom_call.1} parent=1 // pred_fallthru
      _
    %v21 = vld [vmem:[#allocation2] sm:$0xff]
    %22 = vrot.lane.b32.xlu0 %v21, 1
    %v23 = vpop.permute.xlu0 %22
    %24 = vst [vmem:[#allocation5] sm:$0xff] %v23
    // Predicated region
    $region10: #{tpu_custom_call.1} parent=1 // pred_check
      _
    $region11: #{tpu_custom_call.1} parent=1 // pred_check_branch
      %26 = sbr.rel (0) target = $region13
    $region12: #{tpu_custom_call.1} parent=1 // pred_region
      %s28 = ssub.s32 128, 128
      %29 = vsyncadd [#allocation4], %s28
      %s31 = sshll.u32 [#allocation5], 4
      %s32 = int_to_ptr.vmem [resolvable:$true] %s31
      %34 = dma.vmem_to_hbm [thread:$0]  %s32, 128, %s1, [#allocation4]
    $region13: #{tpu_custom_call.1} parent=1 // pred_fallthru
      _
    // Predicated region
    $region14: #{tpu_custom_call.1} parent=1 // pred_check
      _
    $region15: #{tpu_custom_call.1} parent=1 // pred_check_branch
      %36 = sbr.rel (0) target = $region17
    $region16: #{tpu_custom_call.1} parent=1 // pred_region
      %37 = dma.done [#allocation4], 128
    $region17: #{tpu_custom_call.1} parent=1 // pred_fallthru
      _
    %38 = vsyncpa [#allocation3], 1
    %39 = vsyncpa [#allocation4], 1

</llo_original>
